<compile_context>
chip_gen: v6e
topology: v6e:2x2x1
jax: 0.10.0
libtpu: 0.0.40
codegen_flags: <defaults>
</compile_context>

<pallas_src>
import jax
import jax.numpy as jnp
from jax.experimental import pallas as pl
from jax.experimental.pallas import tpu as pltpu


# ----------------------------- kernels ---------------------------------------

def _fold_kernel(x_ref, w_ref, o_ref):
    """out = x @ W with W = U^T @ H^T pre-folded in the wrapper (C >= P path)."""
    o_ref[...] = jnp.dot(
        x_ref[...], w_ref[...], preferred_element_type=jnp.float32
    ).astype(o_ref.dtype)


def _two_step_kernel(x_ref, ut_ref, ht_ref, o_ref):
    """out = (x @ U^T) @ H^T (C < P path; cheaper association, fused in-kernel).

    Note: this reassociation changes fp summation order vs. PyTorch; differences
    stay well within the 1e-4 tolerance used for parity checks.
    """
    t = jnp.dot(x_ref[...], ut_ref[...], preferred_element_type=jnp.float32)
    o_ref[...] = jnp.dot(
        t.astype(ht_ref.dtype), ht_ref[...], preferred_element_type=jnp.float32
    ).astype(o_ref.dtype)


# ----------------------------- wrapper ----------------------------------------

def _round_up(v, m):
    return ((v + m - 1) // m) * m


def _resident_spec(shape):
    """BlockSpec for an operand whose block index never changes.

    Fetched once, so request single buffering (halves its VMEM footprint).
    Falls back silently on JAX versions without `pipeline_mode` support.
    """
    index_map = lambda i: (0,) * len(shape)
    try:
        return pl.BlockSpec(shape, index_map, pipeline_mode=pl.Buffered(1))
    except (TypeError, AttributeError):  # pragma: no cover
        return pl.BlockSpec(shape, index_map)


def nvgf_ups_forward(x, U, hs, Apows, *, use_bf16=False):
    """Pallas TPU forward pass of NVGFUps.

    x:     (1, C, P) float32   (batch must be 1, as the module asserts)
    U:     (N, P)    float32   upsampling matrix (child_size x parent_size)
    hs:    (K, N)    float32   learnable node-variant filter taps
    Apows: (K, N, N) float32   A^k for k = 0..K-1 (module __init__ precompute)
    use_bf16: cast x and the weight operands to bfloat16 (f32 MXU accumulation)
              for full MXU throughput; default off to keep strict f32 parity.
    returns (1, C, N) float32
    """
    assert x.shape[0] == 1, 'Number of input samples must be 1'
    _, C, P = x.shape
    N = U.shape[0]
    K = hs.shape[0]
    assert U.shape == (N, P) and hs.shape == (K, N) and Apows.shape == (K, N, N)

    # ---- one-time (per forward) prep in plain XLA — hoisted out of the kernel.
    # H exactly as in PyTorch; the transpose happens here (cheap outside the
    # kernel), so no symmetry assumption on A is required by this implementation.
    H = jnp.sum(hs[:, :, None] * Apows, axis=0)          # (N, N)
    Ht = H.T                                             # (N, N) == H.t()
    Ut = U.T                                             # (P, N) == U_T

    compute_dtype = jnp.bfloat16 if use_bf16 else jnp.float32
    itemsize = 2 if use_bf16 else 4

    # ---- lane-align P and N (dense MXU tiles, unmasked vst on the output) -----
    P_pad = _round_up(P, 128)
    N_pad = _round_up(N, 128)

    # ---- tile the only workload-scaling axis (channels) -----------------------
    c_aligned = _round_up(C, 8)
    n_tiles = max(1, pl.cdiv(c_aligned, 512))            # <= 512-row tiles
    if n_tiles == 1 and c_aligned > 8:
        n_tiles = 2        # >= 2 grid steps: DMA/compute overlap + both v7x TCs
    tile_c = _round_up(pl.cdiv(c_aligned, n_tiles), 8)
    c_pad = n_tiles * tile_c                             # every block is full

    x_p = jnp.pad(x[0], ((0, c_pad - C), (0, P_pad - P))).astype(compute_dtype)

    fold = C >= P   # static association choice (see header comment)
    if fold:
        # Exactly the PyTorch association: W = U_T @ H.T, then x @ W.
        W = jnp.pad(Ut @ Ht, ((0, P_pad - P), (0, N_pad - N))).astype(compute_dtype)
        weights = (W,)
        kernel = _fold_kernel
        w_specs = [_resident_spec((P_pad, N_pad))]
        w_bytes = P_pad * N_pad * itemsize
    else:
        Ut_p = jnp.pad(Ut, ((0, P_pad - P), (0, N_pad - N))).astype(compute_dtype)
        Ht_p = jnp.pad(Ht, ((0, N_pad - N), (0, N_pad - N))).astype(compute_dtype)
        weights = (Ut_p, Ht_p)
        kernel = _two_step_kernel
        w_specs = [_resident_spec((P_pad, N_pad)), _resident_spec((N_pad, N_pad))]
        w_bytes = (P_pad * N_pad + N_pad * N_pad) * itemsize

    # ---- explicit VMEM budget: actual block footprint + ~25% headroom ---------
    needed = (2 * tile_c * P_pad * itemsize      # x tile, double-buffered
              + 2 * tile_c * N_pad * 4           # out tile (f32), double-buffered
              + w_bytes)                         # resident (single-buffered) weights
    vmem_limit = int(min(64 * 1024 * 1024, max(4 * 1024 * 1024, needed * 5 // 4)))
    # TODO(synk): if N/P grow so the resident weights approach the VMEM budget
    # (v7x: 64 MiB), stream them from HBM (memory_space=pl.ANY + manual
    # double-buffered make_async_copy) or add an "arbitrary" reduction grid axis.

    out_p = pl.pallas_call(
        kernel,
        out_shape=jax.ShapeDtypeStruct((c_pad, N_pad), jnp.float32),
        grid=(n_tiles,),
        in_specs=[pl.BlockSpec((tile_c, P_pad), lambda i: (i, 0))] + w_specs,
        out_specs=pl.BlockSpec((tile_c, N_pad), lambda i: (i, 0)),
        compiler_params=pltpu.CompilerParams(
            dimension_semantics=("parallel",),   # shard C tiles across TCs (v7x)
            vmem_limit_bytes=vmem_limit,
        ),
    )(x_p, *weights)

    return out_p[:C, :N].reshape(1, C, N)


def _reference(x, U, hs, Apows):
    """Pure-JAX reference mirroring the PyTorch module exactly."""
    H = jnp.sum(hs[:, :, None] * Apows, axis=0)          # (N, N)
    return (x[0] @ (U.T @ H.T))[None, :, :]              # (1, C, N)


if __name__ == "__main__":
    # Small shapes consistent with the module:
    #   parent_size P = 8, child_size N = 16, filter order K = 3.
    P, N, K = 8, 16, 3

    key = jax.random.PRNGKey(0)
    k_u, k_a, k_h, k_x1, k_x2 = jax.random.split(key, 5)

    # Upsampling matrix U: (child_size, parent_size)
    U = jax.random.normal(k_u, (N, P), dtype=jnp.float32)

    # Symmetric "adjacency" A (module precondition), well-scaled powers.
    B = jax.random.normal(k_a, (N, N), dtype=jnp.float32)
    A = 0.5 * (B + B.T)
    A = A / jnp.linalg.norm(A, ord=2)

    # Learnable filter taps hs: (K, N)
    hs = 0.1 * jax.random.normal(k_h, (K, N), dtype=jnp.float32)

    # Apows[k] = A^k (module __init__ glue, done once in plain JAX)
    Apows = jnp.stack(
        [jnp.linalg.matrix_power(A, i).astype(jnp.float32) for i in range(K)], axis=0
    )

    # Path A: C < P -> fused (x @ U^T) @ H^T kernel, single tile.
    C1 = 4
    x1 = jax.random.normal(k_x1, (1, C1, P), dtype=jnp.float32)
    out1 = jax.block_until_ready(nvgf_ups_forward(x1, U, hs, Apows))
    ref1 = _reference(x1, U, hs, Apows)
    assert out1.shape == (1, C1, N), out1.shape
    assert jnp.allclose(out1, ref1, atol=1e-4, rtol=1e-4), "path A mismatch vs reference"

    # Path B: C >= P -> wrapper-folded W = U^T @ H^T; ragged C exercises the
    # zero-pad + multi-tile (grid >= 2) path.
    C2 = 20
    x2 = jax.random.normal(k_x2, (1, C2, P), dtype=jnp.float32)
    out2 = jax.block_until_ready(nvgf_ups_forward(x2, U, hs, Apows))
    ref2 = _reference(x2, U, hs, Apows)
    assert out2.shape == (1, C2, N), out2.shape
    assert jnp.allclose(out2, ref2, atol=1e-4, rtol=1e-4), "path B mismatch vs reference"

    print("KERNEL_OK")
</pallas_src>

<mosaic_0001>
module attributes {stable_mosaic.version = 11 : i64} {
  func.func @_two_step_kernel(%arg0: i32, %arg1: memref<8x128xf32, #tpu.memory_space<vmem>>, %arg2: memref<128x128xf32, #tpu.memory_space<vmem>>, %arg3: memref<128x128xf32, #tpu.memory_space<vmem>>, %arg4: memref<8x128xf32, #tpu.memory_space<vmem>>) attributes {dimension_semantics = [#tpu.dimension_semantics<parallel>], iteration_bounds = array<i64: 1>, scalar_prefetch = 0 : i64, scratch_operands = 0 : i64, tpu.core_type = #tpu.core_type<tc>, window_params = [{transform_indices = @transform_0, window_bounds = array<i64: 8, 128>}, {pipeline_mode = #tpu.pipeline_mode<synchronous>, transform_indices = @transform_1, window_bounds = array<i64: 128, 128>}, {pipeline_mode = #tpu.pipeline_mode<synchronous>, transform_indices = @transform_2, window_bounds = array<i64: 128, 128>}, {transform_indices = @transform_3, window_bounds = array<i64: 8, 128>}]} {
    %c0 = arith.constant 0 : index
    %c0_0 = arith.constant 0 : index
    %0 = vector.load %arg1[%c0, %c0_0] : memref<8x128xf32, #tpu.memory_space<vmem>>, vector<8x128xf32>
    %c0_1 = arith.constant 0 : index
    %c0_2 = arith.constant 0 : index
    %1 = vector.load %arg2[%c0_1, %c0_2] : memref<128x128xf32, #tpu.memory_space<vmem>>, vector<128x128xf32>
    %cst = arith.constant dense<0.000000e+00> : vector<8x128xf32>
    %2 = tpu.matmul %0, %1, %cst {dimension_numbers = #tpu.dot_dimension_numbers<[1], [0], [0], [1], [0, 0, 1, 1], [], []>} : vector<8x128xf32>, vector<128x128xf32>, vector<8x128xf32> -> vector<8x128xf32>
    %c0_3 = arith.constant 0 : index
    %c0_4 = arith.constant 0 : index
    %3 = vector.load %arg3[%c0_3, %c0_4] : memref<128x128xf32, #tpu.memory_space<vmem>>, vector<128x128xf32>
    %cst_5 = arith.constant dense<0.000000e+00> : vector<8x128xf32>
    %4 = tpu.matmul %2, %3, %cst_5 {dimension_numbers = #tpu.dot_dimension_numbers<[1], [0], [0], [1], [0, 0, 1, 1], [], []>} : vector<8x128xf32>, vector<128x128xf32>, vector<8x128xf32> -> vector<8x128xf32>
    %c0_6 = arith.constant 0 : index
    %c0_7 = arith.constant 0 : index
    %5 = vector.load %arg4[%c0_6, %c0_7] : memref<8x128xf32, #tpu.memory_space<vmem>>, vector<8x128xf32>
    tpu.vector_store %arg4[%c0_6, %c0_7], %4 {strides = array<i32>} : memref<8x128xf32, #tpu.memory_space<vmem>>, vector<8x128xf32>,
    return
  }
  func.func @transform_0(%arg0: i32) -> (i32, i32) {
    %c0_i32 = arith.constant 0 : i32
    %c0_i32_0 = arith.constant 0 : i32
    return %arg0, %c0_i32 : i32, i32
  }
  func.func @transform_1(%arg0: i32) -> (i32, i32) {
    %c0_i32 = arith.constant 0 : i32
    %c0_i32_0 = arith.constant 0 : i32
    %c0_i32_1 = arith.constant 0 : i32
    return %c0_i32, %c0_i32_0 : i32, i32
  }
  func.func @transform_2(%arg0: i32) -> (i32, i32) {
    %c0_i32 = arith.constant 0 : i32
    %c0_i32_0 = arith.constant 0 : i32
    %c0_i32_1 = arith.constant 0 : i32
    return %c0_i32, %c0_i32_0 : i32, i32
  }
  func.func @transform_3(%arg0: i32) -> (i32, i32) {
    %c0_i32 = arith.constant 0 : i32
    %c0_i32_0 = arith.constant 0 : i32
    return %arg0, %c0_i32 : i32, i32
  }
}

</mosaic_0001>

<llo_original>
// kernel: tpu_custom_call.1
$region0: #{tpu_custom_call.1}
  #allocation0 [shape = 'u32[]', space=smem, size = 0x4, offset = 0x4, fixed_abs, tag = 'smem constant byte address 0x4 - core index']
  #allocation1 [shape = 'u32[144,128]{1,0:T(1,128)}', space=vmem, size = 0x12000, scoped, tag = 'internal scratch']
  %s0 = inlined_call_operand.hbm [shape: f32[8,128], index: 0, kind: input, shape index: {}]
  %s1 = inlined_call_operand.hbm [shape: f32[128,128], index: 1, kind: input, shape index: {}]
  %s2 = inlined_call_operand.hbm [shape: f32[128,128], index: 2, kind: input, shape index: {}]
  %s3 = inlined_call_operand.hbm [shape: f32[8,128], index: 3, kind: output, shape index: {}]
  %s4 = sld [smem:[#allocation0]]
  $region34: #{tpu_custom_call.1} parent=0
    _
  %s6 = ssub.s32 1, %s4
  %s7 = scalar_select 0, %s6, %s4
  $region1: #{tpu_custom_call.1} parent=0
    #allocation2 [shape = 'u8[4096]{0}', space=vmem, size = 0x1000, scoped, tag = 'input window, operand 0, single buffered']
    #allocation3 [shape = 's32[1]{0}', space=sflag, size = 0x4, scoped, tag = 'scoped memory for tpu_custom_call.1']
    #allocation4 [shape = 's32[1]{0}', space=sflag, size = 0x4, scoped, tag = 'scoped memory for tpu_custom_call.1']
    #allocation5 [shape = 'u8[65536]{0}', space=vmem, size = 0x10000, scoped, tag = 'input window, operand 1, single buffered']
    #allocation6 [shape = 's32[1]{0}', space=sflag, size = 0x4, scoped, tag = 'scoped memory for tpu_custom_call.1']
    #allocation7 [shape = 'u8[65536]{0}', space=vmem, size = 0x10000, scoped, tag = 'input window, operand 2, single buffered']
    #allocation8 [shape = 'u8[4096]{0}', space=vmem, size = 0x1000, scoped, tag = 'output window, operand 0, single buffered']
    %8 = vsyncpa [#allocation3], 0
    %9 = vsyncpa [#allocation6], 0
    %10 = vsyncpa [#allocation4], 0
    // Predicated region
    $region2: #{tpu_custom_call.1} parent=1 // pred_check
      _
    $region3: #{tpu_custom_call.1} parent=1 // pred_check_branch
      %12 = sbr.rel (0) target = $region5
    $region4: #{tpu_custom_call.1} parent=1 // pred_region
      %s14 = ssub.s32 128, 128
      %15 = vsyncadd [#allocation3], %s14
      %s17 = sshll.u32 [#allocation2], 4
      %s18 = int_to_ptr.vmem [resolvable:$true] %s17
      %20 = dma.hbm_to_vmem [thread:$0]  %s0, 128, %s18, [#allocation3]
    $region5: #{tpu_custom_call.1} parent=1 // pred_fallthru
      _
    // Predicated region
    $region6: #{tpu_custom_call.1} parent=1 // pred_check
      _
    $region7: #{tpu_custom_call.1} parent=1 // pred_check_branch
      %22 = sbr.rel (0) target = $region9
    $region8: #{tpu_custom_call.1} parent=1 // pred_region
      %s24 = ssub.s32 2048, 2048
      %25 = vsyncadd [#allocation6], %s24
      %s26 = sshll.u32 [#allocation5], 4
      %s27 = int_to_ptr.vmem [resolvable:$true] %s26
      %32 = dma.hbm_to_vmem [thread:$0]  %s1, 2048, %s27, [#allocation6], 128, 128, 8
    $region9: #{tpu_custom_call.1} parent=1 // pred_fallthru
      _
    // Predicated region
    $region10: #{tpu_custom_call.1} parent=1 // pred_check
      _
    $region11: #{tpu_custom_call.1} parent=1 // pred_check_branch
      %34 = sbr.rel (0) target = $region13
    $region12: #{tpu_custom_call.1} parent=1 // pred_region
      %s36 = ssub.s32 2048, 2048
      %37 = vsyncadd [#allocation6], %s36
      %s38 = sshll.u32 [#allocation7], 4
      %s39 = int_to_ptr.vmem [resolvable:$true] %s38
      %44 = dma.hbm_to_vmem [thread:$0]  %s2, 2048, %s39, [#allocation6], 128, 128, 8
    $region13: #{tpu_custom_call.1} parent=1 // pred_fallthru
      _
    // Predicated region
    $region14: #{tpu_custom_call.1} parent=1 // pred_check
      _
    $region15: #{tpu_custom_call.1} parent=1 // pred_check_branch
      %46 = sbr.rel (0) target = $region17
    $region16: #{tpu_custom_call.1} parent=1 // pred_region
      %47 = dma.done [#allocation3], 128
    $region17: #{tpu_custom_call.1} parent=1 // pred_fallthru
      _
    // Predicated region
    $region18: #{tpu_custom_call.1} parent=1 // pred_check
      _
    $region19: #{tpu_custom_call.1} parent=1 // pred_check_branch
      %49 = sbr.rel (0) target = $region21
    $region20: #{tpu_custom_call.1} parent=1 // pred_region
      %50 = dma.done [#allocation6], 2048
    $region21: #{tpu_custom_call.1} parent=1 // pred_fallthru
      _
    // Predicated region
    $region22: #{tpu_custom_call.1} parent=1 // pred_check
      _
    $region23: #{tpu_custom_call.1} parent=1 // pred_check_branch
      %52 = sbr.rel (0) target = $region25
    $region24: #{tpu_custom_call.1} parent=1 // pred_region
      %53 = dma.done [#allocation6], 2048
    $region25: #{tpu_custom_call.1} parent=1 // pred_fallthru
      _
    %v54 = vld [vmem:[#allocation2] sm:$0xff]
    %v55 = vld [vmem:[#allocation5] sm:$0xff]
    %v56 = vld [vmem:[#allocation5 + $0x8] sm:$0xff]
    %v57 = vld [vmem:[#allocation5 + $0x10] sm:$0xff]
    %v58 = vld [vmem:[#allocation5 + $0x18] sm:$0xff]
    %v59 = vld [vmem:[#allocation5 + $0x20] sm:$0xff]
    %v60 = vld [vmem:[#allocation5 + $0x28] sm:$0xff]
    %v61 = vld [vmem:[#allocation5 + $0x30] sm:$0xff]
    %v62 = vld [vmem:[#allocation5 + $0x38] sm:$0xff]
    %v63 = vld [vmem:[#allocation5 + $0x40] sm:$0xff]
    %v64 = vld [vmem:[#allocation5 + $0x48] sm:$0xff]
    %v65 = vld [vmem:[#allocation5 + $0x50] sm:$0xff]
    %v66 = vld [vmem:[#allocation5 + $0x58] sm:$0xff]
    %v67 = vld [vmem:[#allocation5 + $0x60] sm:$0xff]
    %v68 = vld [vmem:[#allocation5 + $0x68] sm:$0xff]
    %v69 = vld [vmem:[#allocation5 + $0x70] sm:$0xff]
    %v70 = vld [vmem:[#allocation5 + $0x78] sm:$0xff]
    %71 = vmatprep.subr.mxu0 0.0
    %72 = vmatpush1.msra.mxu0 %v70
    %73 = vmatprep.subr.mxu0 0.0
    %74 = vmatpush1.msra.mxu0 %v69
    %75 = vmatprep.subr.mxu0 0.0
    %76 = vmatpush1.msra.mxu0 %v68
    %77 = vmatprep.subr.mxu0 0.0
    %78 = vmatpush1.msra.mxu0 %v67
    %79 = vmatprep.subr.mxu0 0.0
    %80 = vmatpush1.msra.mxu0 %v66
    %81 = vmatprep.subr.mxu0 0.0
    %82 = vmatpush1.msra.mxu0 %v65
    %83 = vmatprep.subr.mxu0 0.0
    %84 = vmatpush1.msra.mxu0 %v64
    %85 = vmatprep.subr.mxu0 0.0
    %86 = vmatpush1.msra.mxu0 %v63
    %87 = vmatprep.subr.mxu0 0.0
    %88 = vmatpush1.msra.mxu0 %v62
    %89 = vmatprep.subr.mxu0 0.0
    %90 = vmatpush1.msra.mxu0 %v61
    %91 = vmatprep.subr.mxu0 0.0
    %92 = vmatpush1.msra.mxu0 %v60
    %93 = vmatprep.subr.mxu0 0.0
    %94 = vmatpush1.msra.mxu0 %v59
    %95 = vmatprep.subr.mxu0 0.0
    %96 = vmatpush1.msra.mxu0 %v58
    %97 = vmatprep.subr.mxu0 0.0
    %98 = vmatpush1.msra.mxu0 %v57
    %99 = vmatprep.subr.mxu0 0.0
    %100 = vmatpush1.msra.mxu0 %v56
    %101 = vmatprep.subr.mxu0 0.0
    %102 = vmatpush1.msra.mxu0 %v55
    %103 = vmatprep.subr.mxu0 0.0
    %104 = vmatpush2.msra.mxu0 0.0
    %105 = vmatprep.subr.mxu0 0.0
    %106 = vmatpush2.msra.mxu0 0.0
    %107 = vmatprep.subr.mxu0 0.0
    %108 = vmatpush2.msra.mxu0 0.0
    %109 = vmatprep.subr.mxu0 0.0
    %110 = vmatpush2.msra.mxu0 0.0
    %111 = vmatprep.subr.mxu0 0.0
    %112 = vmatpush2.msra.mxu0 0.0
    %113 = vmatprep.subr.mxu0 0.0
    %114 = vmatpush2.msra.mxu0 0.0
    %115 = vmatprep.subr.mxu0 0.0
    %116 = vmatpush2.msra.mxu0 0.0
    %117 = vmatprep.subr.mxu0 0.0
    %118 = vmatpush2.msra.mxu0 0.0
    %119 = vmatprep.subr.mxu0 0.0
    %120 = vmatpush2.msra.mxu0 0.0
    %121 = vmatprep.subr.mxu0 0.0
    %122 = vmatpush2.msra.mxu0 0.0
    %123 = vmatprep.subr.mxu0 0.0
    %124 = vmatpush2.msra.mxu0 0.0
    %125 = vmatprep.subr.mxu0 0.0
    %126 = vmatpush2.msra.mxu0 0.0
    %127 = vmatprep.subr.mxu0 0.0
    %128 = vmatpush2.msra.mxu0 0.0
    %129 = vmatprep.subr.mxu0 0.0
    %130 = vmatpush2.msra.mxu0 0.0
    %131 = vmatprep.subr.mxu0 0.0
    %132 = vmatpush2.msra.mxu0 0.0
    %133 = vmatprep.subr.mxu0 0.0
    %134 = vmatpush2.msra.mxu0 0.0
    %135 = vmatprep.mubr.f32.mxu0 0.0
    %136 = vmatmul.mubr.f32.gmra.mxu0 %v54
    %v137 = vpop.f32.mrf.mxu0
    %v138 = vadd.f32 0.0, %v137
    %v139 = vpop.f32.mrf.mxu0
    %140 = vdwg.mxu0
    %v141 = vld [vmem:[#allocation7] sm:$0xff]
    %v142 = vld [vmem:[#allocation7 + $0x8] sm:$0xff]
    %v143 = vld [vmem:[#allocation7 + $0x10] sm:$0xff]
    %v144 = vld [vmem:[#allocation7 + $0x18] sm:$0xff]
    %v145 = vld [vmem:[#allocation7 + $0x20] sm:$0xff]
    %v146 = vld [vmem:[#allocation7 + $0x28] sm:$0xff]
    %v147 = vld [vmem:[#allocation7 + $0x30] sm:$0xff]
    %v148 = vld [vmem:[#allocation7 + $0x38] sm:$0xff]
    %v149 = vld [vmem:[#allocation7 + $0x40] sm:$0xff]
    %v150 = vld [vmem:[#allocation7 + $0x48] sm:$0xff]
    %v151 = vld [vmem:[#allocation7 + $0x50] sm:$0xff]
    %v152 = vld [vmem:[#allocation7 + $0x58] sm:$0xff]
    %v153 = vld [vmem:[#allocation7 + $0x60] sm:$0xff]
    %v154 = vld [vmem:[#allocation7 + $0x68] sm:$0xff]
    %v155 = vld [vmem:[#allocation7 + $0x70] sm:$0xff]
    %v156 = vld [vmem:[#allocation7 + $0x78] sm:$0xff]
    %157 = vmatprep.subr.mxu0 0.0
    %158 = vmatpush1.msra.mxu0 %v156
    %159 = vmatprep.subr.mxu0 0.0
    %160 = vmatpush1.msra.mxu0 %v155
    %161 = vmatprep.subr.mxu0 0.0
    %162 = vmatpush1.msra.mxu0 %v154
    %163 = vmatprep.subr.mxu0 0.0
    %164 = vmatpush1.msra.mxu0 %v153
    %165 = vmatprep.subr.mxu0 0.0
    %166 = vmatpush1.msra.mxu0 %v152
    %167 = vmatprep.subr.mxu0 0.0
    %168 = vmatpush1.msra.mxu0 %v151
    %169 = vmatprep.subr.mxu0 0.0
    %170 = vmatpush1.msra.mxu0 %v150
    %171 = vmatprep.subr.mxu0 0.0
    %172 = vmatpush1.msra.mxu0 %v149
    %173 = vmatprep.subr.mxu0 0.0
    %174 = vmatpush1.msra.mxu0 %v148
    %175 = vmatprep.subr.mxu0 0.0
    %176 = vmatpush1.msra.mxu0 %v147
    %177 = vmatprep.subr.mxu0 0.0
    %178 = vmatpush1.msra.mxu0 %v146
    %179 = vmatprep.subr.mxu0 0.0
    %180 = vmatpush1.msra.mxu0 %v145
    %181 = vmatprep.subr.mxu0 0.0
    %182 = vmatpush1.msra.mxu0 %v144
    %183 = vmatprep.subr.mxu0 0.0
    %184 = vmatpush1.msra.mxu0 %v143
    %185 = vmatprep.subr.mxu0 0.0
    %186 = vmatpush1.msra.mxu0 %v142
    %187 = vmatprep.subr.mxu0 0.0
    %188 = vmatpush1.msra.mxu0 %v141
    %189 = vmatprep.subr.mxu0 0.0
    %190 = vmatpush2.msra.mxu0 0.0
    %191 = vmatprep.subr.mxu0 0.0
    %192 = vmatpush2.msra.mxu0 0.0
    %193 = vmatprep.subr.mxu0 0.0
    %194 = vmatpush2.msra.mxu0 0.0
    %195 = vmatprep.subr.mxu0 0.0
    %196 = vmatpush2.msra.mxu0 0.0
    %197 = vmatprep.subr.mxu0 0.0
    %198 = vmatpush2.msra.mxu0 0.0
    %199 = vmatprep.subr.mxu0 0.0
    %200 = vmatpush2.msra.mxu0 0.0
    %201 = vmatprep.subr.mxu0 0.0
    %202 = vmatpush2.msra.mxu0 0.0
    %203 = vmatprep.subr.mxu0 0.0
    %204 = vmatpush2.msra.mxu0 0.0
    %205 = vmatprep.subr.mxu0 0.0
    %206 = vmatpush2.msra.mxu0 0.0
    %207 = vmatprep.subr.mxu0 0.0
    %208 = vmatpush2.msra.mxu0 0.0
    %209 = vmatprep.subr.mxu0 0.0
    %210 = vmatpush2.msra.mxu0 0.0
    %211 = vmatprep.subr.mxu0 0.0
    %212 = vmatpush2.msra.mxu0 0.0
    %213 = vmatprep.subr.mxu0 0.0
    %214 = vmatpush2.msra.mxu0 0.0
    %215 = vmatprep.subr.mxu0 0.0
    %216 = vmatpush2.msra.mxu0 0.0
    %217 = vmatprep.subr.mxu0 0.0
    %218 = vmatpush2.msra.mxu0 0.0
    %219 = vmatprep.subr.mxu0 0.0
    %220 = vmatpush2.msra.mxu0 0.0
    %221 = vmatprep.mubr.f32.mxu0 0.0
    %222 = vmatmul.mubr.f32.gmra.mxu0 %v138
    %v223 = vpop.f32.mrf.mxu0
    %v224 = vadd.f32 0.0, %v223
    %v225 = vpop.f32.mrf.mxu0
    %226 = vdwg.mxu0
    %227 = vst [vmem:[#allocation8] sm:$0xff] %v224
    // Predicated region
    $region26: #{tpu_custom_call.1} parent=1 // pred_check
      _
    $region27: #{tpu_custom_call.1} parent=1 // pred_check_branch
      %229 = sbr.rel (0) target = $region29
    $region28: #{tpu_custom_call.1} parent=1 // pred_region
      %s231 = ssub.s32 128, 128
      %232 = vsyncadd [#allocation4], %s231
      %s234 = sshll.u32 [#allocation8], 4
      %s235 = int_to_ptr.vmem [resolvable:$true] %s234
      %237 = dma.vmem_to_hbm [thread:$0]  %s235, 128, %s3, [#allocation4]
    $region29: #{tpu_custom_call.1} parent=1 // pred_fallthru
      _
    // Predicated region
    $region30: #{tpu_custom_call.1} parent=1 // pred_check
      _
    $region31: #{tpu_custom_call.1} parent=1 // pred_check_branch
      %239 = sbr.rel (0) target = $region33
    $region32: #{tpu_custom_call.1} parent=1 // pred_region
      %240 = dma.done [#allocation4], 128
    $region33: #{tpu_custom_call.1} parent=1 // pred_fallthru
      _
    %241 = vsyncpa [#allocation3], 1
    %242 = vsyncpa [#allocation6], 1
    %243 = vsyncpa [#allocation4], 1

</llo_original>
